<compile_context>
chip_gen: v7x
topology: tpu7x:2x2x1
jax: 0.10.0
libtpu: 0.0.40
codegen_flags: <defaults>
</compile_context>

<pallas_src>
import functools
import math

import jax
import jax.numpy as jnp
from jax.experimental import pallas as pl
from jax.experimental.pallas import tpu as pltpu

_LANE, _SUBLANE = 128, 8


def _round_up(x, m):
    return ((x + m - 1) // m) * m


# ----------------------------------------------------------------------------
# Stage 1 kernel: pf_layer (Linear H->M, Softmax over batch) + partial
# einsum('bs,bsm->bm'), accumulated over S tiles into per-split pf_rets.
# ----------------------------------------------------------------------------
def _pf_rets_kernel(rets_ref, feats_ref, wpf_ref, bpf_ref, pf_ref):
    """One (split, S-tile) grid step.

    rets_ref : (B, tS)      returns tile (f32)
    feats_ref: (B, tS, H)   features tile (f32 or bf16 stream)
    wpf_ref  : (H, M)       pf Linear weight, already (in, out)
    bpf_ref  : (1, M)
    pf_ref   : (1, B, M)    per-split partial pf_rets (resident accumulator)
    """
    B, tS, H = feats_ref.shape
    M = wpf_ref.shape[1]
    s_idx = pl.program_id(1)

    @pl.when(s_idx == 0)
    def _init():
        pf_ref[...] = jnp.zeros_like(pf_ref)

    # --- pf Linear on the MXU.  Inputs may be streamed as bf16; compute is
    # kept in f32 (v5e has no bf16 VPU/EUP; the win of bf16 is HBM bytes only).
    feats = feats_ref[...].astype(jnp.float32)
    h = jnp.dot(feats.reshape(B * tS, H), wpf_ref[...],
                preferred_element_type=jnp.float32)
    h = h.reshape(B, tS, M) + bpf_ref[...]                       # (B, tS, M)

    # --- Softmax over dim=0 (batch), exactly nn.Softmax(dim=0).  Per-(s, m)
    # normalization over B -> independent across S tiles / splits.
    h_max = jnp.max(h, axis=0, keepdims=True)
    e = jnp.exp(h - h_max)
    denom = jnp.sum(e, axis=0, keepdims=True)                    # (1, tS, M) >= 1
    inv = pl.reciprocal(denom, approx=True)                      # EUP slot
    inv = inv * (2.0 - denom * inv)                              # Newton -> ~f32 exact
    w = e * inv                                                  # (B, tS, M)

    # --- einsum('bs,bsm->bm') for this tile.  Kept on the VPU (plus one XLU
    # lane->sublane relayout of rets); hidden under the feats DMA while the
    # kernel is HBM-bound.  If bundle dumps ever show it binding, switch to a
    # b-batched dot_general (MXU has huge slack) -- review item kept conditional.
    rets = rets_ref[...].astype(jnp.float32)
    pf_ref[...] += jnp.sum(rets[:, :, None] * w, axis=1)[None]


# ----------------------------------------------------------------------------
# Stage 2 kernel: mapping layer (fused mean/std head) on the summed partials.
# ----------------------------------------------------------------------------
def _head_kernel(pf_parts_ref, whead_ref, bhead_ref, out_ref, *, num_facts):
    pf = jnp.sum(pf_parts_ref[...], axis=0)                      # (B, M)
    z = jnp.dot(pf, whead_ref[...], preferred_element_type=jnp.float32)
    z = z + bhead_ref[...]                                       # (B, Npad)
    # Softplus (PyTorch beta=1, threshold=20) + clip(min=0) on the std columns
    # only, selected via a lane mask (no sub-128-lane slicing in the kernel).
    col = jax.lax.broadcasted_iota(jnp.int32, z.shape, 1)
    sp = jnp.where(z > 20.0, z, jnp.log1p(jnp.exp(jnp.minimum(z, 20.0))))
    is_std = jnp.logical_and(col >= num_facts, col < 2 * num_facts)
    out_ref[...] = jnp.where(is_std, jnp.maximum(sp, 0.0), z)


# ----------------------------------------------------------------------------
# Sizing helpers
# ----------------------------------------------------------------------------
def _vmem_limit_bytes():
    """Generation-aware scoped-VMEM limit (~75% of physical, leaving headroom)."""
    phys = None
    try:
        info = pltpu.get_tpu_info()
        phys = int(getattr(info, "vmem_capacity_bytes"))
    except Exception:
        phys = None
    if not phys:
        try:
            kind = jax.devices()[0].device_kind.lower()
        except Exception:
            kind = ""
        if "v7" in kind or "7x" in kind:
            phys = 64 << 20            # v7x: 64 MiB per TensorCore
        elif kind:
            phys = 128 << 20           # v4 / v5e / v5p / v6e: 128 MiB
        else:
            phys = 64 << 20            # unknown: be conservative
    return (phys * 3) // 4             # ~96 MiB on 128-MiB chips, ~48 MiB on v7x


def _choose_block_s(S, B, H, M, feat_itemsize, vmem_limit_bytes):
    """Largest legal S tile that fits the VMEM budget.

    Accounts for lane padding of the last dims, double-buffering of streamed
    blocks, the (double-buffered) resident weight/bias/output blocks and the
    in-kernel f32 temporaries of shape (B, tS, M)."""
    H_pad = _round_up(H, _LANE)
    M_pad = _round_up(M, _LANE)
    B_pad = _round_up(B, _SUBLANE)

    def tile_bytes(rows, cols, itemsize):
        return _round_up(rows, _SUBLANE) * _round_up(cols, _LANE) * itemsize

    resident = (2 * tile_bytes(H, M, 4)          # w_pf  (x2 buffers)
                + 2 * tile_bytes(1, M, 4)        # b_pf
                + 2 * B_pad * M_pad * 4          # (1, B, M) output block x2
                + (2 << 20))                     # compiler slack / internal scratch

    per_row = (2 * B * H_pad * feat_itemsize     # feats, double-buffered
               + 2 * B_pad * 4                   # rets, double-buffered
               + 4 * B * M_pad * 4)              # f32 temporaries (h, e, w, ...)
    if feat_itemsize < 4:
        per_row += B * H_pad * 4                 # in-kernel f32 upcast of feats

    avail = max(0, vmem_limit_bytes - resident)
    max_rows = avail // max(1, per_row)

    if max_rows >= S:
        return S                                 # whole S resident (full-dim block)
    # Tiled path: rets puts S on lanes, so the tile must be a multiple of 128;
    # 128 is therefore the smallest legal tile (only hit for extreme B*H, the
    # 25% physical-VMEM headroom absorbs it).  Cap at 2048 rows: measured HBM
    # roofline gains flatten past ~512-1024 rows.
    return max(128, min((max_rows // 128) * 128, 2048))


# ----------------------------------------------------------------------------
# One-time weight packing: transpose to (in, out), fuse mean/std heads, lane-pad.
# ----------------------------------------------------------------------------
def pack_params(params):
    M, H = params["w_pf"].shape
    K = params["w_mean"].shape[0]
    n_out = 2 * K
    n_pad = _round_up(n_out, _LANE)              # lane-dense output slab width

    w_pf_t = jnp.asarray(params["w_pf"], jnp.float32).T                  # (H, M)
    b_pf = jnp.asarray(params["b_pf"], jnp.float32).reshape(1, M)
    w_head = jnp.concatenate([jnp.asarray(params["w_mean"], jnp.float32).T,
                              jnp.asarray(params["w_std"], jnp.float32).T],
                             axis=1)                                     # (M, 2K)
    b_head = jnp.concatenate([jnp.asarray(params["b_mean"], jnp.float32).reshape(1, K),
                              jnp.asarray(params["b_std"], jnp.float32).reshape(1, K)],
                             axis=1)
    if n_pad > n_out:
        w_head = jnp.pad(w_head, ((0, 0), (0, n_pad - n_out)))
        b_head = jnp.pad(b_head, ((0, 0), (0, n_pad - n_out)))
    return {"w_pf_t": w_pf_t, "b_pf": b_pf, "w_head": w_head, "b_head": b_head,
            "num_facts": K, "num_pfs": M, "num_feats": H, "n_pad": n_pad}


# ----------------------------------------------------------------------------
# Wrapper
# ----------------------------------------------------------------------------
def factor_encoder(rets, feats, packed, *, block_s=None, nsplit=None,
                   stream_dtype=None):
    """FactorEncoder forward.  Returns (mean, std), each (B, K).

    stream_dtype: optional storage dtype for the feats HBM stream (e.g.
    jnp.bfloat16 halves the dominant byte traffic); in-kernel compute is f32.
    """
    B, S = rets.shape
    H, M, K, n_pad = (packed["num_feats"], packed["num_pfs"],
                      packed["num_facts"], packed["n_pad"])
    assert feats.shape == (B, S, H)

    rets = rets.astype(jnp.float32)
    feats = feats.astype(stream_dtype if stream_dtype is not None else jnp.float32)
    feat_itemsize = jnp.dtype(feats.dtype).itemsize

    vmem_limit = _vmem_limit_bytes()
    if block_s is None:
        block_s = _choose_block_s(S, B, H, M, feat_itemsize, vmem_limit)

    if block_s >= S:
        block_s, nsplit, s_pad = S, 1, S         # single resident tile, no padding
    else:
        n_tiles = pl.cdiv(S, block_s)
        if nsplit is None:
            # v7x: split the S reduction across the 2 TensorCores (~2x since
            # HBM-bound); on 1-TC chips the extra split costs ~nothing.
            nsplit = 2 if n_tiles >= 2 else 1
        chunk = nsplit * block_s
        s_pad = pl.cdiv(S, chunk) * chunk
        if s_pad != S:
            # Zero padding is exact: padded stocks get finite softmax weights
            # but rets == 0, contributing nothing to pf_rets.
            rets = jnp.pad(rets, ((0, 0), (0, s_pad - S)))
            feats = jnp.pad(feats, ((0, 0), (0, s_pad - S), (0, 0)))

    tiles_per_split = s_pad // (nsplit * block_s)
    grid = (nsplit, tiles_per_split)

    cost = pl.CostEstimate(
        flops=int(2 * B * s_pad * H * M + 6 * B * s_pad * M),
        transcendentals=int(B * s_pad * M),
        bytes_accessed=int(B * s_pad * H * feat_itemsize + B * s_pad * 4
                           + H * M * 4 + M * 4 + nsplit * B * M * 4),
    )

    pf_parts = pl.pallas_call(
        _pf_rets_kernel,
        out_shape=jax.ShapeDtypeStruct((nsplit, B, M), jnp.float32),
        grid_spec=pltpu.PrefetchScalarGridSpec(
            num_scalar_prefetch=0,
            grid=grid,
            in_specs=[
                pl.BlockSpec((B, block_s),
                             lambda c, s: (0, c * tiles_per_split + s)),
                pl.BlockSpec((B, block_s, H),
                             lambda c, s: (0, c * tiles_per_split + s, 0)),
                # Constant blocks: same (0, 0) index every step -> fetched once.
                pl.BlockSpec((H, M), lambda c, s: (0, 0)),
                pl.BlockSpec((1, M), lambda c, s: (0, 0)),
            ],
            out_specs=pl.BlockSpec((1, B, M), lambda c, s: (c, 0, 0)),
        ),
        compiler_params=pltpu.CompilerParams(
            # axis 0: independent per-split partials -> "parallel" (both TCs on
            # v7x); axis 1: S reduction into the resident block -> "arbitrary".
            dimension_semantics=("parallel", "arbitrary"),
            vmem_limit_bytes=int(vmem_limit),
        ),
        cost_estimate=cost,
    )(rets, feats, packed["w_pf_t"], packed["b_pf"])

    out = pl.pallas_call(
        functools.partial(_head_kernel, num_facts=K),
        out_shape=jax.ShapeDtypeStruct((B, n_pad), jnp.float32),
        grid_spec=pltpu.PrefetchScalarGridSpec(
            num_scalar_prefetch=0,
            grid=(1,),
            in_specs=[
                pl.BlockSpec((nsplit, B, M), lambda i: (0, 0, 0)),
                pl.BlockSpec((M, n_pad), lambda i: (0, 0)),
                pl.BlockSpec((1, n_pad), lambda i: (0, 0)),
            ],
            out_specs=pl.BlockSpec((B, n_pad), lambda i: (0, 0)),
        ),
    )(pf_parts, packed["w_head"], packed["b_head"])

    return out[:, :K], out[:, K:2 * K]


# ----------------------------------------------------------------------------
# Params / reference
# ----------------------------------------------------------------------------
def init_params(key, num_facts, num_feats, num_pfs):
    """Deterministic nn.Linear-style init: U(-1/sqrt(fan_in), 1/sqrt(fan_in))."""
    ks = jax.random.split(key, 6)

    def lin(kw, kb, fan_out, fan_in):
        bound = 1.0 / math.sqrt(fan_in)
        w = jax.random.uniform(kw, (fan_out, fan_in), jnp.float32, -bound, bound)
        b = jax.random.uniform(kb, (1, fan_out), jnp.float32, -bound, bound)
        return w, b

    w_pf, b_pf = lin(ks[0], ks[1], num_pfs, num_feats)
    w_mu, b_mu = lin(ks[2], ks[3], num_facts, num_pfs)
    w_sd, b_sd = lin(ks[4], ks[5], num_facts, num_pfs)
    return {"w_pf": w_pf, "b_pf": b_pf,
            "w_mean": w_mu, "b_mean": b_mu,
            "w_std": w_sd, "b_std": b_sd}


def factor_encoder_ref(rets, feats, p):
    """Pure-JAX reference mirroring the PyTorch forward exactly."""
    h = jnp.einsum("bsh,mh->bsm", feats, p["w_pf"]) + p["b_pf"][0]
    w = jax.nn.softmax(h, axis=0)
    pf_rets = jnp.einsum("bs,bsm->bm", rets, w)
    mean = pf_rets @ p["w_mean"].T + p["b_mean"][0]
    std = jax.nn.softplus(pf_rets @ p["w_std"].T + p["b_std"][0])
    return mean, jnp.maximum(std, 0.0)


# ----------------------------------------------------------------------------
# Demo / correctness checks
# ----------------------------------------------------------------------------
if __name__ == "__main__":
    def run_case(B, S, H, M, K, key, **kw):
        k1, k2, k3 = jax.random.split(key, 3)
        rets = jax.random.normal(k1, (B, S), jnp.float32)
        feats = jax.random.normal(k2, (B, S, H), jnp.float32)
        params = init_params(k3, K, H, M)
        packed = pack_params(params)
        mean, std = factor_encoder(rets, feats, packed, **kw)
        jax.block_until_ready((mean, std))
        return rets, feats, params, mean, std

    k0, k1, k2 = jax.random.split(jax.random.PRNGKey(0), 3)

    # 1) Tiny shape, automatic tiling (single resident tile).
    rets, feats, params, mean, std = run_case(2, 8, 16, 32, 8, k0)
    mref, sref = factor_encoder_ref(rets, feats, params)
    assert mean.shape == (2, 8) and std.shape == (2, 8)
    assert jnp.allclose(mean, mref, atol=1e-4, rtol=1e-4), \
        float(jnp.max(jnp.abs(mean - mref)))
    assert jnp.allclose(std, sref, atol=1e-4, rtol=1e-4), \
        float(jnp.max(jnp.abs(std - sref)))

    # 2) Tiled S + zero padding + 2-way "parallel" split (exercises the v7x path).
    rets, feats, params, mean, std = run_case(4, 384, 16, 24, 8, k1, block_s=128)
    mref, sref = factor_encoder_ref(rets, feats, params)
    assert jnp.allclose(mean, mref, atol=1e-4, rtol=1e-4), \
        float(jnp.max(jnp.abs(mean - mref)))
    assert jnp.allclose(std, sref, atol=1e-4, rtol=1e-4), \
        float(jnp.max(jnp.abs(std - sref)))

    # 3) bf16-streamed feats (halved HBM traffic); compare against the same
    #    bf16-rounded inputs run through the f32 reference.
    rets, feats, params, mean, std = run_case(4, 384, 16, 24, 8, k2,
                                              block_s=128,
                                              stream_dtype=jnp.bfloat16)
    feats_r = feats.astype(jnp.bfloat16).astype(jnp.float32)
    mref, sref = factor_encoder_ref(rets, feats_r, params)
    assert jnp.allclose(mean, mref, atol=2e-3, rtol=2e-3), \
        float(jnp.max(jnp.abs(mean - mref)))
    assert jnp.allclose(std, sref, atol=2e-3, rtol=2e-3), \
        float(jnp.max(jnp.abs(std - sref)))

    print("KERNEL_OK")
</pallas_src>

<mosaic_0001>
module attributes {stable_mosaic.version = 11 : i64} {
  func.func @_pf_rets_kernel(%arg0: i32, %arg1: i32, %arg2: memref<2x8xf32, #tpu.memory_space<vmem>>, %arg3: memref<2x8x16xf32, #tpu.memory_space<vmem>>, %arg4: memref<16x32xf32, #tpu.memory_space<vmem>>, %arg5: memref<1x32xf32, #tpu.memory_space<vmem>>, %arg6: memref<1x2x32xf32, #tpu.memory_space<vmem>>) attributes {dimension_semantics = [#tpu.dimension_semantics<parallel>, #tpu.dimension_semantics<arbitrary>], iteration_bounds = array<i64: 1, 1>, scalar_prefetch = 0 : i64, scratch_operands = 0 : i64, tpu.core_type = #tpu.core_type<tc>, window_params = [{transform_indices = @transform_0, window_bounds = array<i64: 2, 8>}, {transform_indices = @transform_1, window_bounds = array<i64: 2, 8, 16>}, {pipeline_mode = #tpu.pipeline_mode<synchronous>, transform_indices = @transform_2, window_bounds = array<i64: 16, 32>}, {pipeline_mode = #tpu.pipeline_mode<synchronous>, transform_indices = @transform_3, window_bounds = array<i64: 1, 32>}, {transform_indices = @transform_4, window_bounds = array<i64: 1, 2, 32>}]} {
    %c0_i32 = arith.constant 0 : i32
    %0 = arith.cmpi eq, %arg1, %c0_i32 : i32
    %1 = arith.extui %0 : i1 to i32
    %c0_i32_0 = arith.constant 0 : i32
    %2 = arith.cmpi ne, %1, %c0_i32_0 : i32
    scf.if %2 {
      %cst_19 = arith.constant 0.000000e+00 : f32
      %35 = vector.broadcast %cst_19 : f32 to vector<1x2x32xf32>
      %c0_20 = arith.constant 0 : index
      %c0_21 = arith.constant 0 : index
      %c0_22 = arith.constant 0 : index
      %36 = vector.load %arg6[%c0_20, %c0_21, %c0_22] : memref<1x2x32xf32, #tpu.memory_space<vmem>>, vector<1x2x32xf32>
      tpu.vector_store %arg6[%c0_20, %c0_21, %c0_22], %35 {strides = array<i32>} : memref<1x2x32xf32, #tpu.memory_space<vmem>>, vector<1x2x32xf32>,
    } else {
    }
    %c0 = arith.constant 0 : index
    %c0_1 = arith.constant 0 : index
    %c0_2 = arith.constant 0 : index
    %3 = vector.load %arg3[%c0, %c0_1, %c0_2] : memref<2x8x16xf32, #tpu.memory_space<vmem>>, vector<2x8x16xf32>
    %4 = vector.shape_cast %3 : vector<2x8x16xf32> to vector<16x16xf32>
    %c0_3 = arith.constant 0 : index
    %c0_4 = arith.constant 0 : index
    %5 = vector.load %arg4[%c0_3, %c0_4] : memref<16x32xf32, #tpu.memory_space<vmem>>, vector<16x32xf32>
    %cst = arith.constant dense<0.000000e+00> : vector<16x32xf32>
    %6 = tpu.matmul %4, %5, %cst {dimension_numbers = #tpu.dot_dimension_numbers<[1], [0], [0], [1], [0, 0, 1, 1], [], []>} : vector<16x16xf32>, vector<16x32xf32>, vector<16x32xf32> -> vector<16x32xf32>
    %7 = vector.shape_cast %6 : vector<16x32xf32> to vector<2x8x32xf32>
    %c0_5 = arith.constant 0 : index
    %c0_6 = arith.constant 0 : index
    %8 = vector.load %arg5[%c0_5, %c0_6] : memref<1x32xf32, #tpu.memory_space<vmem>>, vector<1x32xf32>
    %9 = vector.shape_cast %8 : vector<1x32xf32> to vector<1x1x32xf32>
    %10 = vector.broadcast %9 : vector<1x1x32xf32> to vector<2x8x32xf32>
    %11 = arith.addf %7, %10 : vector<2x8x32xf32>
    %cst_7 = arith.constant dense<0xFF800000> : vector<8x32xf32>
    %12 = vector.multi_reduction <maximumf>, %11, %cst_7 [0] : vector<2x8x32xf32> to vector<8x32xf32>
    %13 = vector.shape_cast %12 : vector<8x32xf32> to vector<1x8x32xf32>
    %14 = vector.broadcast %13 : vector<1x8x32xf32> to vector<2x8x32xf32>
    %15 = arith.subf %11, %14 : vector<2x8x32xf32>
    %16 = math.exp %15 : vector<2x8x32xf32>
    %cst_8 = arith.constant dense<0.000000e+00> : vector<8x32xf32>
    %17 = vector.multi_reduction <add>, %16, %cst_8 [0] : vector<2x8x32xf32> to vector<8x32xf32>
    %18 = vector.shape_cast %17 : vector<8x32xf32> to vector<1x8x32xf32>
    %19 = tpu.reciprocal %18 {approx = true} : vector<1x8x32xf32> -> vector<1x8x32xf32>
    %20 = arith.mulf %18, %19 : vector<1x8x32xf32>
    %cst_9 = arith.constant 2.000000e+00 : f32
    %21 = vector.broadcast %cst_9 : f32 to vector<1x8x32xf32>
    %22 = arith.subf %21, %20 : vector<1x8x32xf32>
    %23 = arith.mulf %19, %22 : vector<1x8x32xf32>
    %24 = vector.broadcast %23 : vector<1x8x32xf32> to vector<2x8x32xf32>
    %25 = arith.mulf %16, %24 : vector<2x8x32xf32>
    %c0_10 = arith.constant 0 : index
    %c0_11 = arith.constant 0 : index
    %26 = vector.load %arg2[%c0_10, %c0_11] : memref<2x8xf32, #tpu.memory_space<vmem>>, vector<2x8xf32>
    %c0_12 = arith.constant 0 : index
    %c0_13 = arith.constant 0 : index
    %c0_14 = arith.constant 0 : index
    %27 = vector.load %arg6[%c0_12, %c0_13, %c0_14] : memref<1x2x32xf32, #tpu.memory_space<vmem>>, vector<1x2x32xf32>
    %28 = vector.shape_cast %26 : vector<2x8xf32> to vector<2x8x1xf32>
    %29 = vector.broadcast %28 : vector<2x8x1xf32> to vector<2x8x32xf32>
    %30 = arith.mulf %29, %25 : vector<2x8x32xf32>
    %cst_15 = arith.constant dense<0.000000e+00> : vector<2x32xf32>
    %31 = vector.multi_reduction <add>, %30, %cst_15 [1] : vector<2x8x32xf32> to vector<2x32xf32>
    %32 = vector.shape_cast %31 : vector<2x32xf32> to vector<1x2x32xf32>
    %33 = arith.addf %27, %32 : vector<1x2x32xf32>
    %c0_16 = arith.constant 0 : index
    %c0_17 = arith.constant 0 : index
    %c0_18 = arith.constant 0 : index
    %34 = vector.load %arg6[%c0_16, %c0_17, %c0_18] : memref<1x2x32xf32, #tpu.memory_space<vmem>>, vector<1x2x32xf32>
    tpu.vector_store %arg6[%c0_16, %c0_17, %c0_18], %33 {strides = array<i32>} : memref<1x2x32xf32, #tpu.memory_space<vmem>>, vector<1x2x32xf32>,
    return
  }
  func.func @transform_0(%arg0: i32, %arg1: i32) -> (i32, i32) {
    %c1_i32 = arith.constant 1 : i32
    %0 = arith.muli %arg0, %c1_i32 : i32
    %1 = arith.addi %0, %arg1 : i32
    %c0_i32 = arith.constant 0 : i32
    %c0_i32_0 = arith.constant 0 : i32
    return %c0_i32, %1 : i32, i32
  }
  func.func @transform_1(%arg0: i32, %arg1: i32) -> (i32, i32, i32) {
    %c1_i32 = arith.constant 1 : i32
    %0 = arith.muli %arg0, %c1_i32 : i32
    %1 = arith.addi %0, %arg1 : i32
    %c0_i32 = arith.constant 0 : i32
    %c0_i32_0 = arith.constant 0 : i32
    %c0_i32_1 = arith.constant 0 : i32
    return %c0_i32, %1, %c0_i32_0 : i32, i32, i32
  }
  func.func @transform_2(%arg0: i32, %arg1: i32) -> (i32, i32) {
    %c0_i32 = arith.constant 0 : i32
    %c0_i32_0 = arith.constant 0 : i32
    %c0_i32_1 = arith.constant 0 : i32
    return %c0_i32, %c0_i32_0 : i32, i32
  }
  func.func @transform_3(%arg0: i32, %arg1: i32) -> (i32, i32) {
    %c0_i32 = arith.constant 0 : i32
    %c0_i32_0 = arith.constant 0 : i32
    %c0_i32_1 = arith.constant 0 : i32
    return %c0_i32, %c0_i32_0 : i32, i32
  }
  func.func @transform_4(%arg0: i32, %arg1: i32) -> (i32, i32, i32) {
    %c0_i32 = arith.constant 0 : i32
    %c0_i32_0 = arith.constant 0 : i32
    %c0_i32_1 = arith.constant 0 : i32
    return %arg0, %c0_i32, %c0_i32_0 : i32, i32, i32
  }
}

</mosaic_0001>

<llo_original>
// kernel: tpu_custom_call.1
$region0: #{tpu_custom_call.1}
  #allocation0 [shape = 'u32[]', space=smem, size = 0x4, offset = 0x4, fixed_abs, tag = 'smem constant byte address 0x4 - core index']
  #allocation1 [shape = 'u32[144,128]{1,0:T(1,128)}', space=vmem, size = 0x12000, scoped, tag = 'internal scratch']
  %s0 = inlined_call_operand.hbm [shape: f32[2,8], index: 0, kind: input, shape index: {}]
  %s1 = inlined_call_operand.hbm [shape: f32[2,8,16], index: 1, kind: input, shape index: {}]
  %s2 = inlined_call_operand.hbm [shape: f32[16,32], index: 2, kind: input, shape index: {}]
  %s3 = inlined_call_operand.hbm [shape: f32[1,32], index: 3, kind: input, shape index: {}]
  %s4 = inlined_call_operand.hbm [shape: f32[1,2,32], index: 4, kind: output, shape index: {}]
  %s5 = sld [smem:[#allocation0]]
  $region46: #{tpu_custom_call.1} parent=0
    _
  %s7 = ssub.s32 1, %s5
  %s8 = scalar_select 0, %s7, %s5
  $region1: #{tpu_custom_call.1} parent=0
    #allocation2 [shape = 'u8[1024]{0}', space=vmem, size = 0x400, scoped, tag = 'input window, operand 0, single buffered']
    #allocation3 [shape = 's32[1]{0}', space=sflag, size = 0x4, scoped, tag = 'scoped memory for tpu_custom_call.1']
    #allocation4 [shape = 's32[1]{0}', space=sflag, size = 0x4, scoped, tag = 'scoped memory for tpu_custom_call.1']
    #allocation5 [shape = 'u8[8192]{0}', space=vmem, size = 0x2000, scoped, tag = 'input window, operand 1, single buffered']
    #allocation6 [shape = 's32[1]{0}', space=sflag, size = 0x4, scoped, tag = 'scoped memory for tpu_custom_call.1']
    #allocation7 [shape = 'u8[8192]{0}', space=vmem, size = 0x2000, scoped, tag = 'input window, operand 2, single buffered']
    #allocation8 [shape = 'u8[512]{0}', space=vmem, size = 0x400, scoped, tag = 'input window, operand 3, single buffered']
    #allocation9 [shape = 's32[1]{0}', space=sflag, size = 0x4, scoped, tag = 'scoped memory for tpu_custom_call.1']
    #allocation10 [shape = 'u8[1024]{0}', space=vmem, size = 0x400, scoped, tag = 'output window, operand 0, single buffered']
    %9 = vsyncpa [#allocation3], 0
    %10 = vsyncpa [#allocation6], 0
    %11 = vsyncpa [#allocation9], 0
    %12 = vsyncpa [#allocation4], 0
    // Predicated region
    $region2: #{tpu_custom_call.1} parent=1 // pred_check
      _
    $region3: #{tpu_custom_call.1} parent=1 // pred_check_branch
      %14 = sbr.rel (0) target = $region5
    $region4: #{tpu_custom_call.1} parent=1 // pred_region
      %s15 = sadd.s32 0, 0
      %s17 = ssub.s32 32, 32
      %18 = vsyncadd [#allocation3], %s17
      %s19 = smul.addr %s15, 32
      %s20 = scalar_lea.hbm %s0, %s19
      %s22 = sshll.u32 [#allocation2], 4
      %s23 = int_to_ptr.vmem [resolvable:$true] %s22
      %25 = dma.hbm_to_vmem [thread:$0]  %s20, 32, %s23, [#allocation3]
    $region5: #{tpu_custom_call.1} parent=1 // pred_fallthru
      _
    // Predicated region
    $region6: #{tpu_custom_call.1} parent=1 // pred_check
      _
    $region7: #{tpu_custom_call.1} parent=1 // pred_check_branch
      %27 = sbr.rel (0) target = $region9
    $region8: #{tpu_custom_call.1} parent=1 // pred_region
      %s28 = sadd.s32 0, 0
      %s30 = ssub.s32 256, 256
      %31 = vsyncadd [#allocation6], %s30
      %s32 = smul.addr %s28, 128
      %s33 = scalar_lea.hbm %s1, %s32
      %s34 = sshll.u32 [#allocation5], 4
      %s35 = int_to_ptr.vmem [resolvable:$true] %s34
      %40 = dma.hbm_to_vmem [thread:$0]  %s33, 256, %s35, [#allocation6], 128, 128, 8
    $region9: #{tpu_custom_call.1} parent=1 // pred_fallthru
      _
    // Predicated region
    $region10: #{tpu_custom_call.1} parent=1 // pred_check
      _
    $region11: #{tpu_custom_call.1} parent=1 // pred_check_branch
      %42 = sbr.rel (0) target = $region13
    $region12: #{tpu_custom_call.1} parent=1 // pred_region
      %s44 = ssub.s32 256, 256
      %45 = vsyncadd [#allocation6], %s44
      %s46 = sshll.u32 [#allocation7], 4
      %s47 = int_to_ptr.vmem [resolvable:$true] %s46
      %52 = dma.hbm_to_vmem [thread:$0]  %s2, 256, %s47, [#allocation6], 128, 128, 8
    $region13: #{tpu_custom_call.1} parent=1 // pred_fallthru
      _
    // Predicated region
    $region14: #{tpu_custom_call.1} parent=1 // pred_check
      _
    $region15: #{tpu_custom_call.1} parent=1 // pred_check_branch
      %54 = sbr.rel (0) target = $region17
    $region16: #{tpu_custom_call.1} parent=1 // pred_region
      %s56 = ssub.s32 16, 16
      %57 = vsyncadd [#allocation9], %s56
      %s59 = sshll.u32 [#allocation8], 4
      %s60 = int_to_ptr.vmem [resolvable:$true] %s59
      %62 = dma.hbm_to_vmem [thread:$0]  %s3, 16, %s60, [#allocation9]
    $region17: #{tpu_custom_call.1} parent=1 // pred_fallthru
      _
    // Predicated region
    $region18: #{tpu_custom_call.1} parent=1 // pred_check
      _
    $region19: #{tpu_custom_call.1} parent=1 // pred_check_branch
      %64 = sbr.rel (0) target = $region21
    $region20: #{tpu_custom_call.1} parent=1 // pred_region
      %65 = dma.done [#allocation3], 32
    $region21: #{tpu_custom_call.1} parent=1 // pred_fallthru
      _
    // Predicated region
    $region22: #{tpu_custom_call.1} parent=1 // pred_check
      _
    $region23: #{tpu_custom_call.1} parent=1 // pred_check_branch
      %67 = sbr.rel (0) target = $region25
    $region24: #{tpu_custom_call.1} parent=1 // pred_region
      %68 = dma.done [#allocation6], 256
    $region25: #{tpu_custom_call.1} parent=1 // pred_fallthru
      _
    // Predicated region
    $region26: #{tpu_custom_call.1} parent=1 // pred_check
      _
    $region27: #{tpu_custom_call.1} parent=1 // pred_check_branch
      %70 = sbr.rel (0) target = $region29
    $region28: #{tpu_custom_call.1} parent=1 // pred_region
      %71 = dma.done [#allocation6], 256
    $region29: #{tpu_custom_call.1} parent=1 // pred_fallthru
      _
    // Predicated region
    $region30: #{tpu_custom_call.1} parent=1 // pred_check
      _
    $region31: #{tpu_custom_call.1} parent=1 // pred_check_branch
      %73 = sbr.rel (0) target = $region33
    $region32: #{tpu_custom_call.1} parent=1 // pred_region
      %74 = dma.done [#allocation9], 16
    $region33: #{tpu_custom_call.1} parent=1 // pred_fallthru
      _
    %s75 = sadd.s32 0, 0
    %s76 = sadd.s32 0, 0
    %p77 = scmp.eq.s32.totalorder 0, 0
    // Predicated region
    $region34: #{tpu_custom_call.1} parent=1 // pred_check
      %p78 = pneg %p77
    $region35: #{tpu_custom_call.1} parent=1 // pred_check_branch
      %80 = sbr.rel (%p78) target = $region37
    $region36: #{tpu_custom_call.1} parent=1 // pred_region
      %vm81 = vcmask 254976
      %82 = vst.msk [vmem:[#allocation10] sm:$0x3] %vm81, 0.0
    $region37: #{tpu_custom_call.1} parent=1 // pred_fallthru
      _
    %v83 = vld [vmem:[#allocation5] sm:$0xff]
    %v84 = vld [vmem:[#allocation5 + $0x8] sm:$0xff]
    %v85 = vld [vmem:[#allocation7] sm:$0xff]
    %v86 = vld [vmem:[#allocation7 + $0x8] sm:$0xff]
    %vm87 = vcmask 130048
    %v89 = vsel %vm87, %v83, 0
    %v92 = vsel %vm87, %v84, 0
    %94 = vmatprep.subr.mxu0 0.0
    %95 = vmatpush1.msra.mxu0 %v85
    %96 = vmatprep.subr.mxu0 0.0
    %97 = vmatpush1.msra.mxu0 %v86
    %98 = vmatprep.subr.mxu0 0.0
    %99 = vmatpush1.msra.mxu0 0.0
    %100 = vmatprep.subr.mxu0 0.0
    %101 = vmatpush1.msra.mxu0 0.0
    %102 = vmatprep.subr.mxu0 0.0
    %103 = vmatpush1.msra.mxu0 0.0
    %104 = vmatprep.subr.mxu0 0.0
    %105 = vmatpush1.msra.mxu0 0.0
    %106 = vmatprep.subr.mxu0 0.0
    %107 = vmatpush1.msra.mxu0 0.0
    %108 = vmatprep.subr.mxu0 0.0
    %109 = vmatpush1.msra.mxu0 0.0
    %110 = vmatprep.subr.mxu0 0.0
    %111 = vmatpush1.msra.mxu0 0.0
    %112 = vmatprep.subr.mxu0 0.0
    %113 = vmatpush1.msra.mxu0 0.0
    %114 = vmatprep.subr.mxu0 0.0
    %115 = vmatpush1.msra.mxu0 0.0
    %116 = vmatprep.subr.mxu0 0.0
    %117 = vmatpush1.msra.mxu0 0.0
    %118 = vmatprep.subr.mxu0 0.0
    %119 = vmatpush1.msra.mxu0 0.0
    %120 = vmatprep.subr.mxu0 0.0
    %121 = vmatpush1.msra.mxu0 0.0
    %122 = vmatprep.subr.mxu0 0.0
    %123 = vmatpush1.msra.mxu0 0.0
    %124 = vmatprep.subr.mxu0 0.0
    %125 = vmatpush1.msra.mxu0 0.0
    %126 = vmatprep.subr.mxu0 0.0
    %127 = vmatpush1.msra.mxu0 0.0
    %128 = vmatprep.subr.mxu0 0.0
    %129 = vmatpush1.msra.mxu0 0.0
    %130 = vmatprep.subr.mxu0 0.0
    %131 = vmatpush1.msra.mxu0 0.0
    %132 = vmatprep.subr.mxu0 0.0
    %133 = vmatpush1.msra.mxu0 0.0
    %134 = vmatprep.subr.mxu0 0.0
    %135 = vmatpush1.msra.mxu0 0.0
    %136 = vmatprep.subr.mxu0 0.0
    %137 = vmatpush1.msra.mxu0 0.0
    %138 = vmatprep.subr.mxu0 0.0
    %139 = vmatpush1.msra.mxu0 0.0
    %140 = vmatprep.subr.mxu0 0.0
    %141 = vmatpush1.msra.mxu0 0.0
    %142 = vmatprep.subr.mxu0 0.0
    %143 = vmatpush1.msra.mxu0 0.0
    %144 = vmatprep.subr.mxu0 0.0
    %145 = vmatpush1.msra.mxu0 0.0
    %146 = vmatprep.subr.mxu0 0.0
    %147 = vmatpush1.msra.mxu0 0.0
    %148 = vmatprep.subr.mxu0 0.0
    %149 = vmatpush1.msra.mxu0 0.0
    %150 = vmatprep.subr.mxu0 0.0
    %151 = vmatpush1.msra.mxu0 0.0
    %152 = vmatprep.subr.mxu0 0.0
    %153 = vmatpush1.msra.mxu0 0.0
    %154 = vmatprep.subr.mxu0 0.0
    %155 = vmatpush1.msra.mxu0 0.0
    %156 = vmatprep.subr.mxu0 0.0
    %157 = vmatpush1.msra.mxu0 0.0
    %158 = vmatprep.mubr.f32.mxu0 0.0
    %159 = vmatmul.mubr.f32.gmra.mrb[0].mxu0 %v89
    %v160 = vpop.f32.mrb[0].mxu0
    %v161 = vadd.f32 0.0, %v160
    %v162 = vpop.f32.mrb[0].mxu0
    %163 = vmatprep.mubr.f32.mxu0 0.0
    %164 = vmatmul.mubr.f32.gmra.mrb[0].mxu0 %v92
    %v165 = vpop.f32.mrb[0].mxu0
    %v166 = vadd.f32 0.0, %v165
    %v167 = vpop.f32.mrb[0].mxu0
    %168 = vdwg.mxu0
    %v169 = vld [vmem:[#allocation8] sm:$0x1]
    %v171 = vlaneseq
    %v172 = vshrl.u32 %v171, 7
    %v173 = vsub.s32 0, %v172
    %v174 = vrot.slane %v169, %v173
    %v176 = vadd.f32 %v161, %v174
    %v177 = vadd.f32 %v166, %v174
    %vm178 = vcmask 261120
    %v179 = vsel %vm178, %v176, -inf
    %v180 = vsel %vm178, %v177, -inf
    %v181 = vmax.f32 %v179, %v180
    %v182 = vsub.f32 %v176, %v181
    %v183 = vsub.f32 %v177, %v181
    %v184 = vmul.f32 %v182, 1.442695
    %v185 = vpow.pop %v184
    %v186 = vmul.f32 %v183, 1.442695
    %v187 = vpow.pop %v186
    %v188 = vsel %vm178, %v185, 0.0
    %v189 = vsel %vm178, %v187, 0.0
    %v190 = vadd.f32 %v188, %v189
    %v191 = vrcp.pop %v190
    %v192 = vmul.f32 %v190, %v191
    %v193 = vsub.f32 2.0, %v192
    %v194 = vmul.f32 %v191, %v193
    %v195 = vmul.f32 %v185, %v194
    %v196 = vmul.f32 %v187, %v194
    %v197 = vld [vmem:[#allocation2] sm:$0x3]
    %v198 = vld [vmem:[#allocation10] sm:$0x3]
    %v199 = vlaneseq
    %v200 = vshrl.u32 %v199, 7
    %v201 = vsub.s32 0, %v200
    %v202 = vrot.slane %v197, %v201
    %204 = vbcast.lane.b32.xlu0 %v202, 256
    %v205 = vpop.permute.xlu0 %204
    %v206 = vlaneseq
    %v207 = vshrl.u32 %v206, 7
    %v208 = vsub.s32 1, %v207
    %v209 = vrot.slane %v197, %v208
    %211 = vbcast.lane.b32.xlu0 %v209, 256
    %v212 = vpop.permute.xlu0 %211
    %v213 = vmul.f32 %v205, %v195
    %v214 = vmul.f32 %v212, %v196
    %v215 = vsel %vm178, %v213, 0.0
    %v216 = vrot.slane %v215, 4
    %v217 = vadd.f32 %v215, %v216
    %v218 = vrot.slane %v217, 2
    %v219 = vadd.f32 %v217, %v218
    %v220 = vrot.slane %v219, 1
    %v221 = vadd.f32 %v219, %v220
    %v222 = vsel %vm178, %v214, 0.0
    %v223 = vrot.slane %v222, 4
    %v224 = vadd.f32 %v222, %v223
    %v225 = vrot.slane %v224, 2
    %v226 = vadd.f32 %v224, %v225
    %v227 = vrot.slane %v226, 1
    %v228 = vadd.f32 %v226, %v227
    %vm231 = vcmask 1041409
    %v232 = vsel %vm231, %v228, %v221
    %v234 = vadd.f32 %v198, %v232
    %vm235 = vcmask 254976
    %236 = vst.msk [vmem:[#allocation10] sm:$0x3] %vm235, %v234
    // Predicated region
    $region38: #{tpu_custom_call.1} parent=1 // pred_check
      _
    $region39: #{tpu_custom_call.1} parent=1 // pred_check_branch
      %238 = sbr.rel (0) target = $region41
    $region40: #{tpu_custom_call.1} parent=1 // pred_region
      %s240 = ssub.s32 32, 32
      %241 = vsyncadd [#allocation4], %s240
      %s243 = sshll.u32 [#allocation10], 4
      %s244 = int_to_ptr.vmem [resolvable:$true] %s243
      %246 = dma.vmem_to_hbm [thread:$0]  %s244, 32, %s4, [#allocation4]
    $region41: #{tpu_custom_call.1} parent=1 // pred_fallthru
      _
    // Predicated region
    $region42: #{tpu_custom_call.1} parent=1 // pred_check
      _
    $region43: #{tpu_custom_call.1} parent=1 // pred_check_branch
      %248 = sbr.rel (0) target = $region45
    $region44: #{tpu_custom_call.1} parent=1 // pred_region
      %249 = dma.done [#allocation4], 32
    $region45: #{tpu_custom_call.1} parent=1 // pred_fallthru
      _
    %250 = vsyncpa [#allocation3], 1
    %251 = vsyncpa [#allocation6], 1
    %252 = vsyncpa [#allocation9], 1
    %253 = vsyncpa [#allocation4], 1

</llo_original>
